<compile_context>
chip_gen: v5e
topology: v5e:2x2
jax: 0.10.0
libtpu: 0.0.40
codegen_flags: <defaults>
</compile_context>

<pallas_src>
import jax
import jax.numpy as jnp
from jax.experimental import pallas as pl
from jax.experimental.pallas import tpu as pltpu


def _round_up(a, b):
    return ((a + b - 1) // b) * b


def gcn_kernel(adj_ref, xw_ref, b_ref, out_ref, acc_ref):
    # adj_ref: (tm, tk)  xw_ref: (tk, f_pad)  b_ref: (1, f_pad)
    # out_ref: (tm, f_pad)  acc_ref: (tm, f_pad) f32 scratch
    k = pl.program_id(1)

    @pl.when(k == 0)
    def _():
        acc_ref[...] = jnp.zeros_like(acc_ref)

    acc_ref[...] += jnp.dot(
        adj_ref[...], xw_ref[...], preferred_element_type=jnp.float32
    )

    @pl.when(k == pl.num_programs(1) - 1)
    def _():
        out_ref[...] = (acc_ref[...] + b_ref[...]).astype(out_ref.dtype)


def gcn_layer(x, adj, weight, bias, *, tm=512, tk=2048,
              compute_dtype=jnp.bfloat16):
    """out = adj @ x @ W.T + b   (GCNLayer.forward)."""
    N, f_in = x.shape
    f_out = weight.shape[0]

    # --- Reassociation (done in plain XLA: tiny compared to the N^2 matmul) ---
    # xw = x @ W.T  -> (N, f_out); also removes the per-step transpose of W.
    xw = jnp.dot(x, weight.T, preferred_element_type=jnp.float32)

    # --- Lane-dense padding of the output feature dim + tile-aligned node dim ---
    f_pad = _round_up(f_out, 128)
    tm_eff = min(tm, _round_up(N, 128))
    tk_eff = min(tk, _round_up(N, 128))
    n_m = _round_up(N, tm_eff)
    n_k = _round_up(N, tk_eff)

    cdt = jnp.dtype(compute_dtype)
    adj_p = jnp.zeros((n_m, n_k), cdt).at[:N, :N].set(adj.astype(cdt))
    xw_p = jnp.zeros((n_k, f_pad), cdt).at[:N, :f_out].set(xw.astype(cdt))
    b_p = jnp.zeros((1, f_pad), jnp.float32).at[0, :f_out].set(
        bias.astype(jnp.float32))

    grid = (n_m // tm_eff, n_k // tk_eff)

    # VMEM footprint (double-buffered adj + xw, acc, out) stays ~a few MiB for
    # these defaults, safely under even the 16 MiB v5e scoped default; raise
    # pltpu.CompilerParams(vmem_limit_bytes=...) if tiles are grown further.
    cost = pl.CostEstimate(
        flops=2 * N * N * f_out + 2 * N * f_in * f_out,
        transcendentals=0,
        bytes_accessed=(n_m * n_k * cdt.itemsize            # adj streamed once
                        + grid[0] * n_k * f_pad * cdt.itemsize  # xw per row-tile
                        + n_m * f_pad * 4),                  # output writeback
    )

    out_padded = pl.pallas_call(
        gcn_kernel,
        out_shape=jax.ShapeDtypeStruct((n_m, f_pad), x.dtype),
        grid_spec=pltpu.PrefetchScalarGridSpec(
            num_scalar_prefetch=0,
            grid=grid,
            in_specs=[
                pl.BlockSpec((tm_eff, tk_eff), lambda i, k: (i, k)),  # adj tile
                pl.BlockSpec((tk_eff, f_pad), lambda i, k: (k, 0)),   # xw tile
                pl.BlockSpec((1, f_pad), lambda i, k: (0, 0)),        # bias (tiny)
            ],
            out_specs=pl.BlockSpec((tm_eff, f_pad), lambda i, k: (i, 0)),
            scratch_shapes=[pltpu.VMEM((tm_eff, f_pad), jnp.float32)],
        ),
        compiler_params=pltpu.CompilerParams(
            dimension_semantics=("parallel", "arbitrary"),
        ),
        cost_estimate=cost,
    )(adj_p, xw_p, b_p)

    return out_padded[:N, :f_out]


def gcn_reference(x, adj, weight, bias):
    h = adj @ x
    return h @ weight.T + bias


if __name__ == "__main__":
    key = jax.random.PRNGKey(0)
    k_x, k_a, k_w, k_b = jax.random.split(key, 4)

    N = 128          # number of graph nodes
    in_features = 32
    out_features = 16

    # Node features
    x = jax.random.normal(k_x, (N, in_features), dtype=jnp.float32)

    # Symmetric-normalized dense adjacency with self loops (typical GCN
    # preprocessing; torch.spmm on a dense representation is just a matmul)
    a = (jax.random.uniform(k_a, (N, N)) < 0.05).astype(jnp.float32)
    a = jnp.maximum(a, a.T) + jnp.eye(N, dtype=jnp.float32)
    deg = jnp.sum(a, axis=1)
    d_inv_sqrt = 1.0 / jnp.sqrt(deg)
    adj = a * d_inv_sqrt[:, None] * d_inv_sqrt[None, :]

    # nn.Linear params: weight (out, in) xavier_uniform_, bias U(-1/sqrt(in), 1/sqrt(in))
    limit_w = jnp.sqrt(6.0 / (in_features + out_features))
    weight = jax.random.uniform(
        k_w, (out_features, in_features), minval=-limit_w, maxval=limit_w,
        dtype=jnp.float32)
    limit_b = 1.0 / jnp.sqrt(in_features)
    bias = jax.random.uniform(
        k_b, (out_features,), minval=-limit_b, maxval=limit_b, dtype=jnp.float32)

    ref = gcn_reference(x, adj, weight, bias)

    # Full-precision path: tight check of the fused/reassociated kernel.
    out_f32 = gcn_layer(x, adj, weight, bias, compute_dtype=jnp.float32)
    out_f32 = jax.block_until_ready(out_f32)
    assert out_f32.shape == (N, out_features)
    assert jnp.allclose(out_f32, ref, atol=1e-4, rtol=1e-4), "f32 mismatch vs reference"

    # Default bf16 path (production config): looser tolerance due to bf16 operands.
    out_bf16 = gcn_layer(x, adj, weight, bias)
    out_bf16 = jax.block_until_ready(out_bf16)
    assert out_bf16.shape == (N, out_features)
    assert jnp.allclose(out_bf16, ref, atol=3e-2, rtol=3e-2), "bf16 mismatch vs reference"

    print("KERNEL_OK")
</pallas_src>

<mosaic_0001>
module attributes {stable_mosaic.version = 11 : i64} {
  func.func @gcn_kernel(%arg0: i32, %arg1: i32, %arg2: memref<128x128xf32, #tpu.memory_space<vmem>>, %arg3: memref<128x128xf32, #tpu.memory_space<vmem>>, %arg4: memref<1x128xf32, #tpu.memory_space<vmem>>, %arg5: memref<128x128xf32, #tpu.memory_space<vmem>>, %arg6: memref<128x128xf32, #tpu.memory_space<vmem>>) attributes {dimension_semantics = [#tpu.dimension_semantics<parallel>, #tpu.dimension_semantics<arbitrary>], iteration_bounds = array<i64: 1, 1>, scalar_prefetch = 0 : i64, scratch_operands = 1 : i64, tpu.core_type = #tpu.core_type<tc>, window_params = [{transform_indices = @transform_0, window_bounds = array<i64: 128, 128>}, {transform_indices = @transform_1, window_bounds = array<i64: 128, 128>}, {pipeline_mode = #tpu.pipeline_mode<synchronous>, transform_indices = @transform_2, window_bounds = array<i64: 1, 128>}, {transform_indices = @transform_3, window_bounds = array<i64: 128, 128>}]} {
    %c0_i32 = arith.constant 0 : i32
    %0 = arith.cmpi eq, %arg1, %c0_i32 : i32
    %1 = arith.extui %0 : i1 to i32
    %c0_i32_0 = arith.constant 0 : i32
    %2 = arith.cmpi ne, %1, %c0_i32_0 : i32
    scf.if %2 {
      %cst_10 = arith.constant 0.000000e+00 : f32
      %12 = vector.broadcast %cst_10 : f32 to vector<128x128xf32>
      %c0_11 = arith.constant 0 : index
      %c0_12 = arith.constant 0 : index
      %13 = vector.load %arg6[%c0_11, %c0_12] : memref<128x128xf32, #tpu.memory_space<vmem>>, vector<128x128xf32>
      tpu.vector_store %arg6[%c0_11, %c0_12], %12 {strides = array<i32>} : memref<128x128xf32, #tpu.memory_space<vmem>>, vector<128x128xf32>,
    } else {
    }
    %c0 = arith.constant 0 : index
    %c0_1 = arith.constant 0 : index
    %3 = vector.load %arg6[%c0, %c0_1] : memref<128x128xf32, #tpu.memory_space<vmem>>, vector<128x128xf32>
    %c0_2 = arith.constant 0 : index
    %c0_3 = arith.constant 0 : index
    %4 = vector.load %arg2[%c0_2, %c0_3] : memref<128x128xf32, #tpu.memory_space<vmem>>, vector<128x128xf32>
    %c0_4 = arith.constant 0 : index
    %c0_5 = arith.constant 0 : index
    %5 = vector.load %arg3[%c0_4, %c0_5] : memref<128x128xf32, #tpu.memory_space<vmem>>, vector<128x128xf32>
    %cst = arith.constant dense<0.000000e+00> : vector<128x128xf32>
    %6 = tpu.matmul %4, %5, %cst {dimension_numbers = #tpu.dot_dimension_numbers<[1], [0], [0], [1], [0, 0, 1, 1], [], []>} : vector<128x128xf32>, vector<128x128xf32>, vector<128x128xf32> -> vector<128x128xf32>
    %7 = arith.addf %3, %6 : vector<128x128xf32>
    %c0_6 = arith.constant 0 : index
    %c0_7 = arith.constant 0 : index
    %8 = vector.load %arg6[%c0_6, %c0_7] : memref<128x128xf32, #tpu.memory_space<vmem>>, vector<128x128xf32>
    tpu.vector_store %arg6[%c0_6, %c0_7], %7 {strides = array<i32>} : memref<128x128xf32, #tpu.memory_space<vmem>>, vector<128x128xf32>,
    %c0_i32_8 = arith.constant 0 : i32
    %9 = arith.cmpi eq, %arg1, %c0_i32_8 : i32
    %10 = arith.extui %9 : i1 to i32
    %c0_i32_9 = arith.constant 0 : i32
    %11 = arith.cmpi ne, %10, %c0_i32_9 : i32
    scf.if %11 {
      %c0_10 = arith.constant 0 : index
      %c0_11 = arith.constant 0 : index
      %12 = vector.load %arg6[%c0_10, %c0_11] : memref<128x128xf32, #tpu.memory_space<vmem>>, vector<128x128xf32>
      %c0_12 = arith.constant 0 : index
      %c0_13 = arith.constant 0 : index
      %13 = vector.load %arg4[%c0_12, %c0_13] : memref<1x128xf32, #tpu.memory_space<vmem>>, vector<1x128xf32>
      %14 = vector.broadcast %13 : vector<1x128xf32> to vector<128x128xf32>
      %15 = arith.addf %12, %14 : vector<128x128xf32>
      %c0_14 = arith.constant 0 : index
      %c0_15 = arith.constant 0 : index
      %16 = vector.load %arg5[%c0_14, %c0_15] : memref<128x128xf32, #tpu.memory_space<vmem>>, vector<128x128xf32>
      tpu.vector_store %arg5[%c0_14, %c0_15], %15 {strides = array<i32>} : memref<128x128xf32, #tpu.memory_space<vmem>>, vector<128x128xf32>,
    } else {
    }
    return
  }
  func.func @transform_0(%arg0: i32, %arg1: i32) -> (i32, i32) {
    %c0_i32 = arith.constant 0 : i32
    return %arg0, %arg1 : i32, i32
  }
  func.func @transform_1(%arg0: i32, %arg1: i32) -> (i32, i32) {
    %c0_i32 = arith.constant 0 : i32
    %c0_i32_0 = arith.constant 0 : i32
    return %arg1, %c0_i32 : i32, i32
  }
  func.func @transform_2(%arg0: i32, %arg1: i32) -> (i32, i32) {
    %c0_i32 = arith.constant 0 : i32
    %c0_i32_0 = arith.constant 0 : i32
    %c0_i32_1 = arith.constant 0 : i32
    return %c0_i32, %c0_i32_0 : i32, i32
  }
  func.func @transform_3(%arg0: i32, %arg1: i32) -> (i32, i32) {
    %c0_i32 = arith.constant 0 : i32
    %c0_i32_0 = arith.constant 0 : i32
    return %arg0, %c0_i32 : i32, i32
  }
}

</mosaic_0001>

<llo_original>
// kernel: tpu_custom_call.1
$region0: #{tpu_custom_call.1}
  #allocation0 [shape = 'u32[]', space=smem, size = 0x4, offset = 0x4, fixed_abs, tag = 'smem constant byte address 0x4 - core index']
  #allocation1 [shape = 'u32[72,128]{1,0:T(1,128)}', space=vmem, size = 0x9000, scoped, tag = 'internal scratch']
  #allocation2 [shape = 'f32[128,128]{1,0:T(8,128)}', space=vmem, size = 0x10000, scoped, tag = 'scratch operand']
  %s0 = inlined_call_operand.hbm [shape: f32[128,128], index: 0, kind: input, shape index: {}]
  %s1 = inlined_call_operand.hbm [shape: f32[128,128], index: 1, kind: input, shape index: {}]
  %s2 = inlined_call_operand.vmem [shape: f32[1,128], index: 2, kind: input, shape index: {}]
  %s3 = inlined_call_operand.hbm [shape: f32[128,128], index: 3, kind: output, shape index: {}]
  %s4 = sld [smem:[#allocation0]]
  $region38: #{tpu_custom_call.1} parent=0
    _
  %s6 = ssub.s32 1, %s4
  %s7 = scalar_select 0, %s6, %s4
  $region1: #{tpu_custom_call.1} parent=0
    #allocation3 [shape = 'u8[65536]{0}', space=vmem, size = 0x10000, scoped, tag = 'input window, operand 0, single buffered']
    #allocation4 [shape = 's32[1]{0}', space=sflag, size = 0x4, scoped, tag = 'scoped memory for tpu_custom_call.1']
    #allocation5 [shape = 's32[1]{0}', space=sflag, size = 0x4, scoped, tag = 'scoped memory for tpu_custom_call.1']
    #allocation6 [shape = 'u8[65536]{0}', space=vmem, size = 0x10000, scoped, tag = 'input window, operand 1, single buffered']
    #allocation7 [shape = 's32[1]{0}', space=sflag, size = 0x4, scoped, tag = 'scoped memory for tpu_custom_call.1']
    #allocation8 [shape = 'u8[65536]{0}', space=vmem, size = 0x10000, scoped, tag = 'output window, operand 0, single buffered']
    %8 = vsyncpa [#allocation4], 0
    %9 = vsyncpa [#allocation7], 0
    %10 = vsyncpa [#allocation5], 0
    // Predicated region
    $region2: #{tpu_custom_call.1} parent=1 // pred_check
      _
    $region3: #{tpu_custom_call.1} parent=1 // pred_check_branch
      %12 = sbr.rel (0) target = $region5
    $region4: #{tpu_custom_call.1} parent=1 // pred_region
      %14 = vsyncadd [#allocation4], 0
      %s15 = sshll.u32 %s0, 4
      %s16 = int_to_ptr.hbm [resolvable:$true] %s15
      %s17 = sshll.u32 [#allocation3], 4
      %s18 = int_to_ptr.vmem [resolvable:$true] %s17
      %23 = dma.hbm_to_vmem [thread:$0]  %s16, 2048, %s18, [#allocation4], 128, 128, 8
    $region5: #{tpu_custom_call.1} parent=1 // pred_fallthru
      _
    // Predicated region
    $region6: #{tpu_custom_call.1} parent=1 // pred_check
      _
    $region7: #{tpu_custom_call.1} parent=1 // pred_check_branch
      %25 = sbr.rel (0) target = $region9
    $region8: #{tpu_custom_call.1} parent=1 // pred_region
      %27 = vsyncadd [#allocation7], 0
      %s28 = sshll.u32 %s1, 4
      %s29 = int_to_ptr.hbm [resolvable:$true] %s28
      %s30 = sshll.u32 [#allocation6], 4
      %s31 = int_to_ptr.vmem [resolvable:$true] %s30
      %36 = dma.hbm_to_vmem [thread:$0]  %s29, 2048, %s31, [#allocation7], 128, 128, 8
    $region9: #{tpu_custom_call.1} parent=1 // pred_fallthru
      _
    // Predicated region
    $region10: #{tpu_custom_call.1} parent=1 // pred_check
      _
    $region11: #{tpu_custom_call.1} parent=1 // pred_check_branch
      %38 = sbr.rel (0) target = $region13
    $region12: #{tpu_custom_call.1} parent=1 // pred_region
      _
    $region13: #{tpu_custom_call.1} parent=1 // pred_fallthru
      _
    // Predicated region
    $region14: #{tpu_custom_call.1} parent=1 // pred_check
      _
    $region15: #{tpu_custom_call.1} parent=1 // pred_check_branch
      %40 = sbr.rel (0) target = $region17
    $region16: #{tpu_custom_call.1} parent=1 // pred_region
      %42 = dma.done [#allocation4], 2048
    $region17: #{tpu_custom_call.1} parent=1 // pred_fallthru
      _
    // Predicated region
    $region18: #{tpu_custom_call.1} parent=1 // pred_check
      _
    $region19: #{tpu_custom_call.1} parent=1 // pred_check_branch
      %44 = sbr.rel (0) target = $region21
    $region20: #{tpu_custom_call.1} parent=1 // pred_region
      %46 = dma.done [#allocation7], 2048
    $region21: #{tpu_custom_call.1} parent=1 // pred_fallthru
      _
    %p47 = scmp.eq.s32.totalorder 0, 0
    // Predicated region
    $region22: #{tpu_custom_call.1} parent=1 // pred_check
      %p48 = pneg %p47
    $region23: #{tpu_custom_call.1} parent=1 // pred_check_branch
      %50 = sbr.rel (%p48) target = $region25
    $region24: #{tpu_custom_call.1} parent=1 // pred_region
      %51 = vst [vmem:[#allocation2] sm:$0xff] 0.0
      %52 = vst [vmem:[#allocation2 + $0x8] sm:$0xff] 0.0
      %53 = vst [vmem:[#allocation2 + $0x10] sm:$0xff] 0.0
      %54 = vst [vmem:[#allocation2 + $0x18] sm:$0xff] 0.0
      %55 = vst [vmem:[#allocation2 + $0x20] sm:$0xff] 0.0
      %56 = vst [vmem:[#allocation2 + $0x28] sm:$0xff] 0.0
      %57 = vst [vmem:[#allocation2 + $0x30] sm:$0xff] 0.0
      %58 = vst [vmem:[#allocation2 + $0x38] sm:$0xff] 0.0
      %59 = vst [vmem:[#allocation2 + $0x40] sm:$0xff] 0.0
      %60 = vst [vmem:[#allocation2 + $0x48] sm:$0xff] 0.0
      %61 = vst [vmem:[#allocation2 + $0x50] sm:$0xff] 0.0
      %62 = vst [vmem:[#allocation2 + $0x58] sm:$0xff] 0.0
      %63 = vst [vmem:[#allocation2 + $0x60] sm:$0xff] 0.0
      %64 = vst [vmem:[#allocation2 + $0x68] sm:$0xff] 0.0
      %65 = vst [vmem:[#allocation2 + $0x70] sm:$0xff] 0.0
      %66 = vst [vmem:[#allocation2 + $0x78] sm:$0xff] 0.0
    $region25: #{tpu_custom_call.1} parent=1 // pred_fallthru
      _
    %v67 = vld [vmem:[#allocation2] sm:$0xff]
    %v68 = vld [vmem:[#allocation2 + $0x8] sm:$0xff]
    %v69 = vld [vmem:[#allocation2 + $0x10] sm:$0xff]
    %v70 = vld [vmem:[#allocation2 + $0x18] sm:$0xff]
    %v71 = vld [vmem:[#allocation2 + $0x20] sm:$0xff]
    %v72 = vld [vmem:[#allocation2 + $0x28] sm:$0xff]
    %v73 = vld [vmem:[#allocation2 + $0x30] sm:$0xff]
    %v74 = vld [vmem:[#allocation2 + $0x38] sm:$0xff]
    %v75 = vld [vmem:[#allocation2 + $0x40] sm:$0xff]
    %v76 = vld [vmem:[#allocation2 + $0x48] sm:$0xff]
    %v77 = vld [vmem:[#allocation2 + $0x50] sm:$0xff]
    %v78 = vld [vmem:[#allocation2 + $0x58] sm:$0xff]
    %v79 = vld [vmem:[#allocation2 + $0x60] sm:$0xff]
    %v80 = vld [vmem:[#allocation2 + $0x68] sm:$0xff]
    %v81 = vld [vmem:[#allocation2 + $0x70] sm:$0xff]
    %v82 = vld [vmem:[#allocation2 + $0x78] sm:$0xff]
    %v83 = vld [vmem:[#allocation3] sm:$0xff]
    %v84 = vld [vmem:[#allocation3 + $0x8] sm:$0xff]
    %v85 = vld [vmem:[#allocation3 + $0x10] sm:$0xff]
    %v86 = vld [vmem:[#allocation3 + $0x18] sm:$0xff]
    %v87 = vld [vmem:[#allocation3 + $0x20] sm:$0xff]
    %v88 = vld [vmem:[#allocation3 + $0x28] sm:$0xff]
    %v89 = vld [vmem:[#allocation3 + $0x30] sm:$0xff]
    %v90 = vld [vmem:[#allocation3 + $0x38] sm:$0xff]
    %v91 = vld [vmem:[#allocation3 + $0x40] sm:$0xff]
    %v92 = vld [vmem:[#allocation3 + $0x48] sm:$0xff]
    %v93 = vld [vmem:[#allocation3 + $0x50] sm:$0xff]
    %v94 = vld [vmem:[#allocation3 + $0x58] sm:$0xff]
    %v95 = vld [vmem:[#allocation3 + $0x60] sm:$0xff]
    %v96 = vld [vmem:[#allocation3 + $0x68] sm:$0xff]
    %v97 = vld [vmem:[#allocation3 + $0x70] sm:$0xff]
    %v98 = vld [vmem:[#allocation3 + $0x78] sm:$0xff]
    %v99 = vld [vmem:[#allocation6] sm:$0xff]
    %v100 = vld [vmem:[#allocation6 + $0x8] sm:$0xff]
    %v101 = vld [vmem:[#allocation6 + $0x10] sm:$0xff]
    %v102 = vld [vmem:[#allocation6 + $0x18] sm:$0xff]
    %v103 = vld [vmem:[#allocation6 + $0x20] sm:$0xff]
    %v104 = vld [vmem:[#allocation6 + $0x28] sm:$0xff]
    %v105 = vld [vmem:[#allocation6 + $0x30] sm:$0xff]
    %v106 = vld [vmem:[#allocation6 + $0x38] sm:$0xff]
    %v107 = vld [vmem:[#allocation6 + $0x40] sm:$0xff]
    %v108 = vld [vmem:[#allocation6 + $0x48] sm:$0xff]
    %v109 = vld [vmem:[#allocation6 + $0x50] sm:$0xff]
    %v110 = vld [vmem:[#allocation6 + $0x58] sm:$0xff]
    %v111 = vld [vmem:[#allocation6 + $0x60] sm:$0xff]
    %v112 = vld [vmem:[#allocation6 + $0x68] sm:$0xff]
    %v113 = vld [vmem:[#allocation6 + $0x70] sm:$0xff]
    %v114 = vld [vmem:[#allocation6 + $0x78] sm:$0xff]
    %115 = vmatpush.msra.mxu0 %v114
    %116 = vmatpush.msra.mxu0 %v113
    %117 = vmatpush.msra.mxu0 %v112
    %118 = vmatpush.msra.mxu0 %v111
    %119 = vmatpush.msra.mxu0 %v110
    %120 = vmatpush.msra.mxu0 %v109
    %121 = vmatpush.msra.mxu0 %v108
    %122 = vmatpush.msra.mxu0 %v107
    %123 = vmatpush.msra.mxu0 %v106
    %124 = vmatpush.msra.mxu0 %v105
    %125 = vmatpush.msra.mxu0 %v104
    %126 = vmatpush.msra.mxu0 %v103
    %127 = vmatpush.msra.mxu0 %v102
    %128 = vmatpush.msra.mxu0 %v101
    %129 = vmatpush.msra.mxu0 %v100
    %130 = vmatpush.msra.mxu0 %v99
    %131 = vmatmul.f32.gmra.mxu0 %v83
    %v132 = vpop.f32.mrf.mxu0
    %v133 = vadd.f32 0.0, %v132
    %134 = vmatmul.f32.gmra.mxu0 %v84
    %v135 = vpop.f32.mrf.mxu0
    %v136 = vadd.f32 0.0, %v135
    %137 = vmatmul.f32.gmra.mxu0 %v85
    %v138 = vpop.f32.mrf.mxu0
    %v139 = vadd.f32 0.0, %v138
    %140 = vmatmul.f32.gmra.mxu0 %v86
    %v141 = vpop.f32.mrf.mxu0
    %v142 = vadd.f32 0.0, %v141
    %143 = vmatmul.f32.gmra.mxu0 %v87
    %v144 = vpop.f32.mrf.mxu0
    %v145 = vadd.f32 0.0, %v144
    %146 = vmatmul.f32.gmra.mxu0 %v88
    %v147 = vpop.f32.mrf.mxu0
    %v148 = vadd.f32 0.0, %v147
    %149 = vmatmul.f32.gmra.mxu0 %v89
    %v150 = vpop.f32.mrf.mxu0
    %v151 = vadd.f32 0.0, %v150
    %152 = vmatmul.f32.gmra.mxu0 %v90
    %v153 = vpop.f32.mrf.mxu0
    %v154 = vadd.f32 0.0, %v153
    %155 = vmatmul.f32.gmra.mxu0 %v91
    %v156 = vpop.f32.mrf.mxu0
    %v157 = vadd.f32 0.0, %v156
    %158 = vmatmul.f32.gmra.mxu0 %v92
    %v159 = vpop.f32.mrf.mxu0
    %v160 = vadd.f32 0.0, %v159
    %161 = vmatmul.f32.gmra.mxu0 %v93
    %v162 = vpop.f32.mrf.mxu0
    %v163 = vadd.f32 0.0, %v162
    %164 = vmatmul.f32.gmra.mxu0 %v94
    %v165 = vpop.f32.mrf.mxu0
    %v166 = vadd.f32 0.0, %v165
    %167 = vmatmul.f32.gmra.mxu0 %v95
    %v168 = vpop.f32.mrf.mxu0
    %v169 = vadd.f32 0.0, %v168
    %170 = vmatmul.f32.gmra.mxu0 %v96
    %v171 = vpop.f32.mrf.mxu0
    %v172 = vadd.f32 0.0, %v171
    %173 = vmatmul.f32.gmra.mxu0 %v97
    %v174 = vpop.f32.mrf.mxu0
    %v175 = vadd.f32 0.0, %v174
    %176 = vmatmul.f32.gmra.mxu0 %v98
    %v177 = vpop.f32.mrf.mxu0
    %v178 = vadd.f32 0.0, %v177
    %179 = vdwg.mxu0
    %v180 = vadd.f32 %v67, %v133
    %v181 = vadd.f32 %v68, %v136
    %v182 = vadd.f32 %v69, %v139
    %v183 = vadd.f32 %v70, %v142
    %v184 = vadd.f32 %v71, %v145
    %v185 = vadd.f32 %v72, %v148
    %v186 = vadd.f32 %v73, %v151
    %v187 = vadd.f32 %v74, %v154
    %v188 = vadd.f32 %v75, %v157
    %v189 = vadd.f32 %v76, %v160
    %v190 = vadd.f32 %v77, %v163
    %v191 = vadd.f32 %v78, %v166
    %v192 = vadd.f32 %v79, %v169
    %v193 = vadd.f32 %v80, %v172
    %v194 = vadd.f32 %v81, %v175
    %v195 = vadd.f32 %v82, %v178
    %196 = vst [vmem:[#allocation2] sm:$0xff] %v180
    %197 = vst [vmem:[#allocation2 + $0x8] sm:$0xff] %v181
    %198 = vst [vmem:[#allocation2 + $0x10] sm:$0xff] %v182
    %199 = vst [vmem:[#allocation2 + $0x18] sm:$0xff] %v183
    %200 = vst [vmem:[#allocation2 + $0x20] sm:$0xff] %v184
    %201 = vst [vmem:[#allocation2 + $0x28] sm:$0xff] %v185
    %202 = vst [vmem:[#allocation2 + $0x30] sm:$0xff] %v186
    %203 = vst [vmem:[#allocation2 + $0x38] sm:$0xff] %v187
    %204 = vst [vmem:[#allocation2 + $0x40] sm:$0xff] %v188
    %205 = vst [vmem:[#allocation2 + $0x48] sm:$0xff] %v189
    %206 = vst [vmem:[#allocation2 + $0x50] sm:$0xff] %v190
    %207 = vst [vmem:[#allocation2 + $0x58] sm:$0xff] %v191
    %208 = vst [vmem:[#allocation2 + $0x60] sm:$0xff] %v192
    %209 = vst [vmem:[#allocation2 + $0x68] sm:$0xff] %v193
    %210 = vst [vmem:[#allocation2 + $0x70] sm:$0xff] %v194
    %211 = vst [vmem:[#allocation2 + $0x78] sm:$0xff] %v195
    // Predicated region
    $region26: #{tpu_custom_call.1} parent=1 // pred_check
      %p212 = pneg %p47
    $region27: #{tpu_custom_call.1} parent=1 // pred_check_branch
      %214 = sbr.rel (%p212) target = $region29
    $region28: #{tpu_custom_call.1} parent=1 // pred_region
      %v215 = vld [vmem:[#allocation2] sm:$0xff]
      %v216 = vld [vmem:[#allocation2 + $0x8] sm:$0xff]
      %v217 = vld [vmem:[#allocation2 + $0x10] sm:$0xff]
      %v218 = vld [vmem:[#allocation2 + $0x18] sm:$0xff]
      %v219 = vld [vmem:[#allocation2 + $0x20] sm:$0xff]
      %v220 = vld [vmem:[#allocation2 + $0x28] sm:$0xff]
      %v221 = vld [vmem:[#allocation2 + $0x30] sm:$0xff]
      %v222 = vld [vmem:[#allocation2 + $0x38] sm:$0xff]
      %v223 = vld [vmem:[#allocation2 + $0x40] sm:$0xff]
      %v224 = vld [vmem:[#allocation2 + $0x48] sm:$0xff]
      %v225 = vld [vmem:[#allocation2 + $0x50] sm:$0xff]
      %v226 = vld [vmem:[#allocation2 + $0x58] sm:$0xff]
      %v227 = vld [vmem:[#allocation2 + $0x60] sm:$0xff]
      %v228 = vld [vmem:[#allocation2 + $0x68] sm:$0xff]
      %v229 = vld [vmem:[#allocation2 + $0x70] sm:$0xff]
      %v230 = vld [vmem:[#allocation2 + $0x78] sm:$0xff]
      %v231 = vld [vmem:[%s2] sm:$0x1]
      %v233 = vperm.slane %v231, 0
      %v235 = vadd.f32 %v215, %v233
      %v236 = vadd.f32 %v216, %v233
      %v237 = vadd.f32 %v217, %v233
      %v238 = vadd.f32 %v218, %v233
      %v239 = vadd.f32 %v219, %v233
      %v240 = vadd.f32 %v220, %v233
      %v241 = vadd.f32 %v221, %v233
      %v242 = vadd.f32 %v222, %v233
      %v243 = vadd.f32 %v223, %v233
      %v244 = vadd.f32 %v224, %v233
      %v245 = vadd.f32 %v225, %v233
      %v246 = vadd.f32 %v226, %v233
      %v247 = vadd.f32 %v227, %v233
      %v248 = vadd.f32 %v228, %v233
      %v249 = vadd.f32 %v229, %v233
      %v250 = vadd.f32 %v230, %v233
      %251 = vst [vmem:[#allocation8] sm:$0xff] %v235
      %252 = vst [vmem:[#allocation8 + $0x8] sm:$0xff] %v236
      %253 = vst [vmem:[#allocation8 + $0x10] sm:$0xff] %v237
      %254 = vst [vmem:[#allocation8 + $0x18] sm:$0xff] %v238
      %255 = vst [vmem:[#allocation8 + $0x20] sm:$0xff] %v239
      %256 = vst [vmem:[#allocation8 + $0x28] sm:$0xff] %v240
      %257 = vst [vmem:[#allocation8 + $0x30] sm:$0xff] %v241
      %258 = vst [vmem:[#allocation8 + $0x38] sm:$0xff] %v242
      %259 = vst [vmem:[#allocation8 + $0x40] sm:$0xff] %v243
      %260 = vst [vmem:[#allocation8 + $0x48] sm:$0xff] %v244
      %261 = vst [vmem:[#allocation8 + $0x50] sm:$0xff] %v245
      %262 = vst [vmem:[#allocation8 + $0x58] sm:$0xff] %v246
      %263 = vst [vmem:[#allocation8 + $0x60] sm:$0xff] %v247
      %264 = vst [vmem:[#allocation8 + $0x68] sm:$0xff] %v248
      %265 = vst [vmem:[#allocation8 + $0x70] sm:$0xff] %v249
      %266 = vst [vmem:[#allocation8 + $0x78] sm:$0xff] %v250
    $region29: #{tpu_custom_call.1} parent=1 // pred_fallthru
      _
    // Predicated region
    $region30: #{tpu_custom_call.1} parent=1 // pred_check
      _
    $region31: #{tpu_custom_call.1} parent=1 // pred_check_branch
      %268 = sbr.rel (0) target = $region33
    $region32: #{tpu_custom_call.1} parent=1 // pred_region
      %270 = vsyncadd [#allocation5], 0
      %s271 = sshll.u32 [#allocation8], 4
      %s272 = int_to_ptr.vmem [resolvable:$true] %s271
      %s273 = sshll.u32 %s3, 4
      %s274 = int_to_ptr.hbm [resolvable:$true] %s273
      %279 = dma.vmem_to_hbm [thread:$0]  %s272, 2048, %s274, [#allocation5], 128, 128, 8
    $region33: #{tpu_custom_call.1} parent=1 // pred_fallthru
      _
    // Predicated region
    $region34: #{tpu_custom_call.1} parent=1 // pred_check
      _
    $region35: #{tpu_custom_call.1} parent=1 // pred_check_branch
      %281 = sbr.rel (0) target = $region37
    $region36: #{tpu_custom_call.1} parent=1 // pred_region
      %283 = dma.done [#allocation5], 2048
    $region37: #{tpu_custom_call.1} parent=1 // pred_fallthru
      _
    %284 = vsyncpa [#allocation4], 1
    %285 = vsyncpa [#allocation7], 1
    %286 = vsyncpa [#allocation5], 1

</llo_original>
